<compile_context>
chip_gen: v6e
topology: v6e:2x2x1
jax: 0.10.0
libtpu: 0.0.40
codegen_flags: <defaults>
</compile_context>

<pallas_src>
import jax
import jax.numpy as jnp
from jax import lax
from jax.experimental import pallas as pl
from jax.experimental.pallas import tpu as pltpu

_LANES = 128
_SUBLANES = 8


def _round_up(x, m):
    return ((x + m - 1) // m) * m


def _make_kernel(block_rows, width, num_tiles, valid_rows_last):
    """Build the per-tile partial-sum kernel (all sizes are static)."""
    groups = block_rows // _SUBLANES
    has_tail = valid_rows_last != block_rows  # last block is partial

    def kernel(pred_ref, targ_ref, mask_ref, num_ref, den_ref):
        p = pred_ref[...].astype(jnp.float32)
        t = targ_ref[...].astype(jnp.float32)
        m = mask_ref[...].astype(jnp.float32)

        r = p - t
        sq = m * r * r

        def emit(sq_v, m_v):
            # Fold whole (8, width) row-groups: pure VPU vreg adds, no XLU
            # cross-lane work in the hot loop.
            num_ref[...] = jnp.sum(sq_v.reshape(groups, _SUBLANES, width), axis=0)
            den_ref[...] = jnp.sum(m_v.reshape(groups, _SUBLANES, width), axis=0)

        if has_tail:
            i = pl.program_id(0)

            @pl.when(i == num_tiles - 1)
            def _():
                row = lax.broadcasted_iota(jnp.int32, (block_rows, width), 0)
                valid = row < valid_rows_last
                # Out-of-bounds rows of the boundary block hold garbage
                # (possibly NaN/Inf) -> select instead of multiplying.
                emit(jnp.where(valid, sq, 0.0), jnp.where(valid, m, 0.0))

            @pl.when(i != num_tiles - 1)
            def _():
                emit(sq, m)
        else:
            emit(sq, m)

    return kernel


def masked_mse_loss(prediction, target, mask, *, max_block_rows=4096):
    """Batch-based masked MSE loss for (B, H, W) inputs (any float/int dtype)."""
    assert prediction.shape == target.shape == mask.shape
    assert prediction.ndim == 3
    B, H, W = prediction.shape
    n = B * H * W

    # Copy-free 2-D view of the three streams (no jnp.pad, no extra HBM pass).
    if n % _LANES == 0:
        rows, width = n // _LANES, _LANES          # ideal lane-dense layout
    else:
        rows, width = B * H, W                     # last dim == full array dim

    pred2 = prediction.reshape(rows, width)
    targ2 = target.reshape(rows, width)
    mask2 = mask.reshape(rows, width)

    block_rows = _round_up(min(max_block_rows, rows), _SUBLANES)
    if rows >= 2 * _SUBLANES:
        # Guarantee >= 2 grid steps so both v7x TensorCores get work.
        block_rows = min(block_rows, _round_up(pl.cdiv(rows, 2), _SUBLANES))
    num_tiles = pl.cdiv(rows, block_rows)
    valid_rows_last = rows - (num_tiles - 1) * block_rows

    kernel = _make_kernel(block_rows, width, num_tiles, valid_rows_last)

    # Explicit VMEM budget: 3 input streams x 2 pipeline buffers, 2 tiny output
    # slots x 2 buffers, plus f32 elementwise temps (upcasts / r / sq).
    # TODO(synk): if the Mosaic dump shows all temps materialized at full tile
    # size, strip-mine the body with lax.fori_loop over (8, width) row groups.
    in_tile_bytes = sum(block_rows * width * a.dtype.itemsize
                        for a in (pred2, targ2, mask2))
    out_tile_bytes = 2 * _SUBLANES * width * 4
    temp_bytes = 6 * block_rows * width * 4
    vmem_budget = 2 * in_tile_bytes + 2 * out_tile_bytes + temp_bytes + (1 << 20)
    vmem_limit = int(min(max(vmem_budget, 32 * 1024 * 1024), 56 * 1024 * 1024))

    in_bytes = sum(int(a.size) * a.dtype.itemsize for a in (pred2, targ2, mask2))
    out_bytes = 2 * num_tiles * _SUBLANES * width * 4

    num_part, den_part = pl.pallas_call(
        kernel,
        out_shape=(
            jax.ShapeDtypeStruct((num_tiles * _SUBLANES, width), jnp.float32),
            jax.ShapeDtypeStruct((num_tiles * _SUBLANES, width), jnp.float32),
        ),
        grid=(num_tiles,),
        in_specs=[
            pl.BlockSpec((block_rows, width), lambda i: (i, 0)),
            pl.BlockSpec((block_rows, width), lambda i: (i, 0)),
            pl.BlockSpec((block_rows, width), lambda i: (i, 0)),
        ],
        out_specs=(
            pl.BlockSpec((_SUBLANES, width), lambda i: (i, 0)),
            pl.BlockSpec((_SUBLANES, width), lambda i: (i, 0)),
        ),
        compiler_params=pltpu.CompilerParams(
            dimension_semantics=("parallel",),
            vmem_limit_bytes=vmem_limit,
        ),
        cost_estimate=pl.CostEstimate(
            flops=5 * n,
            transcendentals=0,
            bytes_accessed=in_bytes + out_bytes,
        ),
    )(pred2, targ2, mask2)

    # Tiny final reduction + safe divide (no NaN when mask is all-zero).
    numerator = jnp.sum(num_part)
    divisor = 2.0 * jnp.sum(den_part)
    safe_divisor = jnp.where(divisor == 0.0, jnp.float32(1.0), divisor)
    return jnp.where(divisor == 0.0, jnp.float32(0.0), numerator / safe_divisor)


# TODO(synk): only the default 'batch-based' reduction is implemented; the
# 'image-based' reduction path of the PyTorch module is not covered here.


def _reference_loss(prediction, target, mask):
    """Pure-JAX reference mirroring PyTorch mse_loss / reduction_batch_based."""
    M = jnp.sum(mask, axis=(1, 2))
    res = prediction - target
    image_loss = jnp.sum(mask * res * res, axis=(1, 2))
    divisor = jnp.sum(2.0 * M)
    return jnp.where(divisor == 0.0, 0.0, jnp.sum(image_loss) / divisor)


if __name__ == "__main__":
    key = jax.random.PRNGKey(0)
    keys = jax.random.split(key, 9)

    # Primary small test: (B, H, W) = (2, 16, 16); n % 128 == 0 -> lane-dense.
    B, H, W = 2, 16, 16
    prediction = jax.random.normal(keys[0], (B, H, W), dtype=jnp.float32)
    target = jax.random.normal(keys[1], (B, H, W), dtype=jnp.float32)
    mask = (jax.random.uniform(keys[2], (B, H, W)) > 0.3).astype(jnp.float32)

    loss = masked_mse_loss(prediction, target, mask)
    jax.block_until_ready(loss)
    ref = _reference_loss(prediction, target, mask)
    assert jnp.allclose(loss, ref, rtol=1e-5, atol=1e-6), (loss, ref)

    # All-zero mask path (PyTorch returns 0).
    zero_mask_loss = masked_mse_loss(prediction, target, jnp.zeros_like(mask))
    jax.block_until_ready(zero_mask_loss)
    assert float(zero_mask_loss) == 0.0

    # Multi-tile + partial (ragged) last block: 12 lane-rows, block_rows=8.
    B2, H2, W2 = 2, 16, 48
    p2 = jax.random.normal(keys[3], (B2, H2, W2), dtype=jnp.float32)
    t2 = jax.random.normal(keys[4], (B2, H2, W2), dtype=jnp.float32)
    m2 = (jax.random.uniform(keys[5], (B2, H2, W2)) > 0.5).astype(jnp.float32)
    loss2 = masked_mse_loss(p2, t2, m2, max_block_rows=8)
    jax.block_until_ready(loss2)
    ref2 = _reference_loss(p2, t2, m2)
    assert jnp.allclose(loss2, ref2, rtol=1e-5, atol=1e-6), (loss2, ref2)

    # n not a multiple of 128 -> natural (B*H, W) view + in-kernel row masking.
    B3, H3, W3 = 2, 7, 9
    p3 = jax.random.normal(keys[6], (B3, H3, W3), dtype=jnp.float32)
    t3 = jax.random.normal(keys[7], (B3, H3, W3), dtype=jnp.float32)
    m3 = (jax.random.uniform(keys[8], (B3, H3, W3)) > 0.4).astype(jnp.float32)
    loss3 = masked_mse_loss(p3, t3, m3)
    jax.block_until_ready(loss3)
    ref3 = _reference_loss(p3, t3, m3)
    assert jnp.allclose(loss3, ref3, rtol=1e-5, atol=1e-6), (loss3, ref3)

    # bf16 pred/target pass straight through (kernel upcasts to f32 internally).
    pb = prediction.astype(jnp.bfloat16)
    tb = target.astype(jnp.bfloat16)
    loss_bf16 = masked_mse_loss(pb, tb, mask)
    jax.block_until_ready(loss_bf16)
    ref_bf16 = _reference_loss(pb.astype(jnp.float32), tb.astype(jnp.float32), mask)
    assert jnp.allclose(loss_bf16, ref_bf16, rtol=1e-5, atol=1e-6), (loss_bf16, ref_bf16)

    print("KERNEL_OK")
</pallas_src>

<mosaic_0001>
module attributes {stable_mosaic.version = 11 : i64} {
  func.func @kernel(%arg0: i32, %arg1: memref<8x128xf32, #tpu.memory_space<vmem>>, %arg2: memref<8x128xf32, #tpu.memory_space<vmem>>, %arg3: memref<8x128xf32, #tpu.memory_space<vmem>>, %arg4: memref<8x128xf32, #tpu.memory_space<vmem>>, %arg5: memref<8x128xf32, #tpu.memory_space<vmem>>) attributes {dimension_semantics = [#tpu.dimension_semantics<parallel>], iteration_bounds = array<i64: 1>, scalar_prefetch = 0 : i64, scratch_operands = 0 : i64, tpu.core_type = #tpu.core_type<tc>, window_params = [{transform_indices = @transform_0, window_bounds = array<i64: 8, 128>}, {transform_indices = @transform_1, window_bounds = array<i64: 8, 128>}, {transform_indices = @transform_2, window_bounds = array<i64: 8, 128>}, {transform_indices = @transform_3, window_bounds = array<i64: 8, 128>}, {transform_indices = @transform_4, window_bounds = array<i64: 8, 128>}]} {
    %c0 = arith.constant 0 : index
    %c0_0 = arith.constant 0 : index
    %0 = vector.load %arg1[%c0, %c0_0] : memref<8x128xf32, #tpu.memory_space<vmem>>, vector<8x128xf32>
    %c0_1 = arith.constant 0 : index
    %c0_2 = arith.constant 0 : index
    %1 = vector.load %arg2[%c0_1, %c0_2] : memref<8x128xf32, #tpu.memory_space<vmem>>, vector<8x128xf32>
    %c0_3 = arith.constant 0 : index
    %c0_4 = arith.constant 0 : index
    %2 = vector.load %arg3[%c0_3, %c0_4] : memref<8x128xf32, #tpu.memory_space<vmem>>, vector<8x128xf32>
    %3 = arith.subf %0, %1 : vector<8x128xf32>
    %4 = arith.mulf %2, %3 : vector<8x128xf32>
    %5 = arith.mulf %4, %3 : vector<8x128xf32>
    %c0_i32 = arith.constant 0 : i32
    %6 = arith.cmpi eq, %arg0, %c0_i32 : i32
    %7 = arith.extui %6 : i1 to i32
    %c0_i32_5 = arith.constant 0 : i32
    %8 = arith.cmpi ne, %7, %c0_i32_5 : i32
    scf.if %8 {
      %12 = tpu.iota {dimensions = array<i32: 0>} : vector<8x128xi32>
      %c4_i32 = arith.constant 4 : i32
      %13 = vector.broadcast %c4_i32 : i32 to vector<8x128xi32>
      %14 = arith.cmpi slt, %12, %13 : vector<8x128xi32>
      %cst = arith.constant 0.000000e+00 : f32
      %15 = vector.broadcast %cst : f32 to vector<8x128xf32>
      %16 = arith.select %14, %5, %15 : vector<8x128xi1>, vector<8x128xf32>
      %cst_8 = arith.constant 0.000000e+00 : f32
      %17 = vector.broadcast %cst_8 : f32 to vector<8x128xf32>
      %18 = arith.select %14, %2, %17 : vector<8x128xi1>, vector<8x128xf32>
      %19 = vector.shape_cast %16 : vector<8x128xf32> to vector<1x8x128xf32>
      %cst_9 = arith.constant dense<0.000000e+00> : vector<8x128xf32>
      %20 = vector.multi_reduction <add>, %19, %cst_9 [0] : vector<1x8x128xf32> to vector<8x128xf32>
      %c0_10 = arith.constant 0 : index
      %c0_11 = arith.constant 0 : index
      %21 = vector.load %arg4[%c0_10, %c0_11] : memref<8x128xf32, #tpu.memory_space<vmem>>, vector<8x128xf32>
      tpu.vector_store %arg4[%c0_10, %c0_11], %20 {strides = array<i32>} : memref<8x128xf32, #tpu.memory_space<vmem>>, vector<8x128xf32>,
      %22 = vector.shape_cast %18 : vector<8x128xf32> to vector<1x8x128xf32>
      %cst_12 = arith.constant dense<0.000000e+00> : vector<8x128xf32>
      %23 = vector.multi_reduction <add>, %22, %cst_12 [0] : vector<1x8x128xf32> to vector<8x128xf32>
      %c0_13 = arith.constant 0 : index
      %c0_14 = arith.constant 0 : index
      %24 = vector.load %arg5[%c0_13, %c0_14] : memref<8x128xf32, #tpu.memory_space<vmem>>, vector<8x128xf32>
      tpu.vector_store %arg5[%c0_13, %c0_14], %23 {strides = array<i32>} : memref<8x128xf32, #tpu.memory_space<vmem>>, vector<8x128xf32>,
    } else {
    }
    %c0_i32_6 = arith.constant 0 : i32
    %9 = arith.cmpi ne, %arg0, %c0_i32_6 : i32
    %10 = arith.extui %9 : i1 to i32
    %c0_i32_7 = arith.constant 0 : i32
    %11 = arith.cmpi ne, %10, %c0_i32_7 : i32
    scf.if %11 {
      %12 = vector.shape_cast %5 : vector<8x128xf32> to vector<1x8x128xf32>
      %cst = arith.constant dense<0.000000e+00> : vector<8x128xf32>
      %13 = vector.multi_reduction <add>, %12, %cst [0] : vector<1x8x128xf32> to vector<8x128xf32>
      %c0_8 = arith.constant 0 : index
      %c0_9 = arith.constant 0 : index
      %14 = vector.load %arg4[%c0_8, %c0_9] : memref<8x128xf32, #tpu.memory_space<vmem>>, vector<8x128xf32>
      tpu.vector_store %arg4[%c0_8, %c0_9], %13 {strides = array<i32>} : memref<8x128xf32, #tpu.memory_space<vmem>>, vector<8x128xf32>,
      %15 = vector.shape_cast %2 : vector<8x128xf32> to vector<1x8x128xf32>
      %cst_10 = arith.constant dense<0.000000e+00> : vector<8x128xf32>
      %16 = vector.multi_reduction <add>, %15, %cst_10 [0] : vector<1x8x128xf32> to vector<8x128xf32>
      %c0_11 = arith.constant 0 : index
      %c0_12 = arith.constant 0 : index
      %17 = vector.load %arg5[%c0_11, %c0_12] : memref<8x128xf32, #tpu.memory_space<vmem>>, vector<8x128xf32>
      tpu.vector_store %arg5[%c0_11, %c0_12], %16 {strides = array<i32>} : memref<8x128xf32, #tpu.memory_space<vmem>>, vector<8x128xf32>,
    } else {
    }
    return
  }
  func.func @transform_0(%arg0: i32) -> (i32, i32) {
    %c0_i32 = arith.constant 0 : i32
    %c0_i32_0 = arith.constant 0 : i32
    return %arg0, %c0_i32 : i32, i32
  }
  func.func @transform_1(%arg0: i32) -> (i32, i32) {
    %c0_i32 = arith.constant 0 : i32
    %c0_i32_0 = arith.constant 0 : i32
    return %arg0, %c0_i32 : i32, i32
  }
  func.func @transform_2(%arg0: i32) -> (i32, i32) {
    %c0_i32 = arith.constant 0 : i32
    %c0_i32_0 = arith.constant 0 : i32
    return %arg0, %c0_i32 : i32, i32
  }
  func.func @transform_3(%arg0: i32) -> (i32, i32) {
    %c0_i32 = arith.constant 0 : i32
    %c0_i32_0 = arith.constant 0 : i32
    return %arg0, %c0_i32 : i32, i32
  }
  func.func @transform_4(%arg0: i32) -> (i32, i32) {
    %c0_i32 = arith.constant 0 : i32
    %c0_i32_0 = arith.constant 0 : i32
    return %arg0, %c0_i32 : i32, i32
  }
}

</mosaic_0001>

<llo_original>
// kernel: tpu_custom_call.1
$region0: #{tpu_custom_call.1}
  #allocation0 [shape = 'u32[]', space=smem, size = 0x4, offset = 0x4, fixed_abs, tag = 'smem constant byte address 0x4 - core index']
  #allocation1 [shape = 'u32[144,128]{1,0:T(1,128)}', space=vmem, size = 0x12000, scoped, tag = 'internal scratch']
  %s0 = inlined_call_operand.hbm [shape: f32[4,128], index: 0, kind: input, shape index: {}]
  %s1 = inlined_call_operand.hbm [shape: f32[4,128], index: 1, kind: input, shape index: {}]
  %s2 = inlined_call_operand.hbm [shape: f32[4,128], index: 2, kind: input, shape index: {}]
  %s3 = inlined_call_operand.hbm [shape: f32[8,128], index: 3, kind: output, shape index: {0}]
  %s4 = inlined_call_operand.hbm [shape: f32[8,128], index: 4, kind: output, shape index: {1}]
  %5 = xla_tuple %s3, %s4
  %s6 = sld [smem:[#allocation0]]
  $region50: #{tpu_custom_call.1} parent=0
    _
  %s8 = ssub.s32 1, %s6
  %s9 = scalar_select 0, %s8, %s6
  $region1: #{tpu_custom_call.1} parent=0
    #allocation2 [shape = 'u8[4096]{0}', space=vmem, size = 0x1000, scoped, tag = 'input window, operand 0, single buffered']
    #allocation3 [shape = 's32[1]{0}', space=sflag, size = 0x4, scoped, tag = 'scoped memory for tpu_custom_call.1']
    #allocation4 [shape = 's32[1]{0}', space=sflag, size = 0x4, scoped, tag = 'scoped memory for tpu_custom_call.1']
    #allocation5 [shape = 'u8[4096]{0}', space=vmem, size = 0x1000, scoped, tag = 'input window, operand 1, single buffered']
    #allocation6 [shape = 's32[1]{0}', space=sflag, size = 0x4, scoped, tag = 'scoped memory for tpu_custom_call.1']
    #allocation7 [shape = 'u8[4096]{0}', space=vmem, size = 0x1000, scoped, tag = 'input window, operand 2, single buffered']
    #allocation8 [shape = 'u8[4096]{0}', space=vmem, size = 0x1000, scoped, tag = 'output window, operand 0, single buffered']
    #allocation9 [shape = 'u8[4096]{0}', space=vmem, size = 0x1000, scoped, tag = 'output window, operand 1, single buffered']
    #allocation10 [shape = 's32[1]{0}', space=sflag, size = 0x4, scoped, tag = 'scoped memory for tpu_custom_call.1']
    %10 = vsyncpa [#allocation3], 0
    %11 = vsyncpa [#allocation6], 0
    %12 = vsyncpa [#allocation4], 0
    %13 = vsyncpa [#allocation10], 0
    // Predicated region
    $region2: #{tpu_custom_call.1} parent=1 // pred_check
      _
    $region3: #{tpu_custom_call.1} parent=1 // pred_check_branch
      %15 = sbr.rel (0) target = $region5
    $region4: #{tpu_custom_call.1} parent=1 // pred_region
      %s17 = ssub.s32 128, 64
      %18 = vsyncadd [#allocation3], %s17
      %s19 = sshll.u32 [#allocation2], 4
      %s20 = int_to_ptr.vmem [resolvable:$true] %s19
      %25 = dma.hbm_to_vmem [thread:$0]  %s0, 64, %s20, [#allocation3], 64, 64, 4
    $region5: #{tpu_custom_call.1} parent=1 // pred_fallthru
      _
    // Predicated region
    $region6: #{tpu_custom_call.1} parent=1 // pred_check
      _
    $region7: #{tpu_custom_call.1} parent=1 // pred_check_branch
      %27 = sbr.rel (0) target = $region9
    $region8: #{tpu_custom_call.1} parent=1 // pred_region
      %s29 = ssub.s32 128, 64
      %30 = vsyncadd [#allocation6], %s29
      %s31 = sshll.u32 [#allocation5], 4
      %s32 = int_to_ptr.vmem [resolvable:$true] %s31
      %37 = dma.hbm_to_vmem [thread:$0]  %s1, 64, %s32, [#allocation6], 64, 64, 4
    $region9: #{tpu_custom_call.1} parent=1 // pred_fallthru
      _
    // Predicated region
    $region10: #{tpu_custom_call.1} parent=1 // pred_check
      _
    $region11: #{tpu_custom_call.1} parent=1 // pred_check_branch
      %39 = sbr.rel (0) target = $region13
    $region12: #{tpu_custom_call.1} parent=1 // pred_region
      %s41 = ssub.s32 128, 64
      %42 = vsyncadd [#allocation6], %s41
      %s43 = sshll.u32 [#allocation7], 4
      %s44 = int_to_ptr.vmem [resolvable:$true] %s43
      %49 = dma.hbm_to_vmem [thread:$0]  %s2, 64, %s44, [#allocation6], 64, 64, 4
    $region13: #{tpu_custom_call.1} parent=1 // pred_fallthru
      _
    // Predicated region
    $region14: #{tpu_custom_call.1} parent=1 // pred_check
      _
    $region15: #{tpu_custom_call.1} parent=1 // pred_check_branch
      %51 = sbr.rel (0) target = $region17
    $region16: #{tpu_custom_call.1} parent=1 // pred_region
      %52 = dma.done [#allocation3], 128
    $region17: #{tpu_custom_call.1} parent=1 // pred_fallthru
      _
    // Predicated region
    $region18: #{tpu_custom_call.1} parent=1 // pred_check
      _
    $region19: #{tpu_custom_call.1} parent=1 // pred_check_branch
      %54 = sbr.rel (0) target = $region21
    $region20: #{tpu_custom_call.1} parent=1 // pred_region
      %55 = dma.done [#allocation6], 128
    $region21: #{tpu_custom_call.1} parent=1 // pred_fallthru
      _
    // Predicated region
    $region22: #{tpu_custom_call.1} parent=1 // pred_check
      _
    $region23: #{tpu_custom_call.1} parent=1 // pred_check_branch
      %57 = sbr.rel (0) target = $region25
    $region24: #{tpu_custom_call.1} parent=1 // pred_region
      %58 = dma.done [#allocation6], 128
    $region25: #{tpu_custom_call.1} parent=1 // pred_fallthru
      _
    %v59 = vld [vmem:[#allocation2] sm:$0xff]
    %v60 = vld [vmem:[#allocation5] sm:$0xff]
    %v61 = vld [vmem:[#allocation7] sm:$0xff]
    %v62 = vsub.f32 %v59, %v60
    %v63 = vmul.f32 %v61, %v62
    %v64 = vmul.f32 %v63, %v62
    %p65 = scmp.eq.s32.totalorder 0, 0
    // Predicated region
    $region26: #{tpu_custom_call.1} parent=1 // pred_check
      %p66 = pneg %p65
    $region27: #{tpu_custom_call.1} parent=1 // pred_check_branch
      %68 = sbr.rel (%p66) target = $region29
    $region28: #{tpu_custom_call.1} parent=1 // pred_region
      %v69 = vlaneseq
      %v70 = vshrl.u32 %v69, 7
      %vm71 = vcmp.lt.s32.totalorder %v70, 4
      %v72 = vsel %vm71, %v64, 0.0
      %v73 = vsel %vm71, %v61, 0.0
      %v74 = vadd.f32 %v72, 0.0
      %75 = vst [vmem:[#allocation8] sm:$0xff] %v74
      %v76 = vadd.f32 %v73, 0.0
      %77 = vst [vmem:[#allocation9] sm:$0xff] %v76
    $region29: #{tpu_custom_call.1} parent=1 // pred_fallthru
      _
    %p78 = scmp.ne.s32.totalorder 0, 0
    // Predicated region
    $region30: #{tpu_custom_call.1} parent=1 // pred_check
      %p79 = pneg %p78
    $region31: #{tpu_custom_call.1} parent=1 // pred_check_branch
      %81 = sbr.rel (%p79) target = $region33
    $region32: #{tpu_custom_call.1} parent=1 // pred_region
      %v82 = vadd.f32 %v64, 0.0
      %83 = vst [vmem:[#allocation8] sm:$0xff] %v82
      %v84 = vadd.f32 %v61, 0.0
      %85 = vst [vmem:[#allocation9] sm:$0xff] %v84
    $region33: #{tpu_custom_call.1} parent=1 // pred_fallthru
      _
    // Predicated region
    $region34: #{tpu_custom_call.1} parent=1 // pred_check
      _
    $region35: #{tpu_custom_call.1} parent=1 // pred_check_branch
      %87 = sbr.rel (0) target = $region37
    $region36: #{tpu_custom_call.1} parent=1 // pred_region
      %s89 = ssub.s32 128, 128
      %90 = vsyncadd [#allocation4], %s89
      %s92 = sshll.u32 [#allocation8], 4
      %s93 = int_to_ptr.vmem [resolvable:$true] %s92
      %95 = dma.vmem_to_hbm [thread:$0]  %s93, 128, %s3, [#allocation4]
    $region37: #{tpu_custom_call.1} parent=1 // pred_fallthru
      _
    // Predicated region
    $region38: #{tpu_custom_call.1} parent=1 // pred_check
      _
    $region39: #{tpu_custom_call.1} parent=1 // pred_check_branch
      %97 = sbr.rel (0) target = $region41
    $region40: #{tpu_custom_call.1} parent=1 // pred_region
      %s99 = ssub.s32 128, 128
      %100 = vsyncadd [#allocation10], %s99
      %s102 = sshll.u32 [#allocation9], 4
      %s103 = int_to_ptr.vmem [resolvable:$true] %s102
      %105 = dma.vmem_to_hbm [thread:$0]  %s103, 128, %s4, [#allocation10]
    $region41: #{tpu_custom_call.1} parent=1 // pred_fallthru
      _
    // Predicated region
    $region42: #{tpu_custom_call.1} parent=1 // pred_check
      _
    $region43: #{tpu_custom_call.1} parent=1 // pred_check_branch
      %107 = sbr.rel (0) target = $region45
    $region44: #{tpu_custom_call.1} parent=1 // pred_region
      %108 = dma.done [#allocation4], 128
    $region45: #{tpu_custom_call.1} parent=1 // pred_fallthru
      _
    // Predicated region
    $region46: #{tpu_custom_call.1} parent=1 // pred_check
      _
    $region47: #{tpu_custom_call.1} parent=1 // pred_check_branch
      %110 = sbr.rel (0) target = $region49
    $region48: #{tpu_custom_call.1} parent=1 // pred_region
      %111 = dma.done [#allocation10], 128
    $region49: #{tpu_custom_call.1} parent=1 // pred_fallthru
      _
    %112 = vsyncpa [#allocation3], 1
    %113 = vsyncpa [#allocation6], 1
    %114 = vsyncpa [#allocation4], 1
    %115 = vsyncpa [#allocation10], 1

</llo_original>
